<compile_context>
chip_gen: v5e
topology: v5e:2x2
jax: 0.10.0
libtpu: 0.0.40
codegen_flags: <defaults>
</compile_context>

<pallas_src>
import functools

import jax
import jax.numpy as jnp
from jax.experimental import pallas as pl
from jax.experimental.pallas import tpu as pltpu


def _round_up(x, m):
    return ((x + m - 1) // m) * m


def _last_layer_kernel(apply_relu, x_ref, wT_ref, b_ref, o_ref):
    """o = (relu?)(x) @ W^T + b for the single live (last) layer.  Operands are padded
    to lane-dense shapes; W is pre-transposed to [in_f, out_f] so no in-kernel w.T."""
    x = x_ref[...]
    if apply_relu:
        x = jnp.maximum(x, 0)                      # relu(x), hoisted & applied once
    y = jnp.dot(x, wT_ref[...], preferred_element_type=jnp.float32)
    y = y + b_ref[...].astype(jnp.float32)         # bias add in f32
    o_ref[...] = y.astype(o_ref.dtype)


def simple_mlp_forward(x, weights, biases):
    """x: [batch, in_dim]; weights[l]: [out_f, in_f] (PyTorch layout); biases[l]: [out_f]."""
    num_layers = len(weights)
    batch, in_dim = x.shape

    # Only the last layer reaches the output (see header comment) — drop dead layers.
    w_last = weights[-1]                           # [out_f, in_f]
    b_last = biases[-1]                            # [out_f]
    out_f, in_f = w_last.shape

    if in_f != in_dim:
        raise ValueError(
            f"Reference forward feeds x (width {in_dim}) into every layer, but the last "
            f"layer expects in_features={in_f}; for num_layers>=2 this requires "
            f"in_dim == hidden_dim.")

    apply_relu = num_layers >= 2
    dtype = x.dtype
    itemsize = jnp.dtype(dtype).itemsize

    # Lane-dense / sublane-aligned padded shapes.
    K = _round_up(in_f, 128)                       # contraction dim (lanes of x, sublanes of W)
    N = _round_up(out_f, 128)                      # output lanes
    tm = min(512, _round_up(batch, 8))             # rows per grid step (>=8, <=512)
    M = _round_up(batch, tm)                       # padded rows; multiple of tm

    x_p = jnp.pad(x, ((0, M - batch), (0, K - in_dim)))
    wT_p = jnp.pad(w_last.T.astype(dtype), ((0, K - in_f), (0, N - out_f)))   # [K, N]
    b_p = jnp.pad(b_last.reshape(1, -1), ((0, 0), (0, N - out_f)))            # [1, N]

    grid = (M // tm,)

    # Scheduling hint for XLA: only the live matmul's work.
    cost = pl.CostEstimate(
        flops=2 * batch * in_f * out_f,
        transcendentals=0,
        bytes_accessed=(batch * in_f + in_f * out_f + out_f + batch * out_f) * itemsize,
    )

    # VMEM budget: double-buffered x/out tiles + resident W + bias + headroom,
    # capped at v7x's 64 MiB physical VMEM.
    vmem_bytes = (2 * (tm * K + tm * N) + K * N + N) * itemsize + (4 << 20)
    vmem_bytes = int(min(max(vmem_bytes, 16 << 20), 64 << 20))

    out_p = pl.pallas_call(
        functools.partial(_last_layer_kernel, apply_relu),
        out_shape=jax.ShapeDtypeStruct((M, N), dtype),
        grid=grid,
        in_specs=[
            pl.BlockSpec((tm, K), lambda i: (i, 0)),    # x rows tile
            pl.BlockSpec((K, N), lambda i: (0, 0)),     # whole (padded) weight, resident
            pl.BlockSpec((1, N), lambda i: (0, 0)),     # bias, resident
        ],
        out_specs=pl.BlockSpec((tm, N), lambda i: (i, 0)),
        compiler_params=pltpu.CompilerParams(
            dimension_semantics=("parallel",),          # rows independent -> megacore / 2 TCs
            vmem_limit_bytes=vmem_bytes,
        ),
        cost_estimate=cost,
    )(x_p, wT_p, b_p)

    return out_p[:batch, :out_f]


if __name__ == "__main__":
    # Small shapes consistent with the module; in_dim == hidden_dim is required by the
    # reference forward (it feeds relu(x) into every layer).
    batch, in_dim, hidden_dim, num_layers = 8, 32, 32, 2

    key = jax.random.PRNGKey(0)
    keys = jax.random.split(key, 1 + 2 * num_layers)
    x = jax.random.normal(keys[0], (batch, in_dim), dtype=jnp.float32)

    # Deterministic PyTorch-Linear-style init: U(-1/sqrt(fan_in), 1/sqrt(fan_in)).
    weights, biases = [], []
    for l in range(num_layers):
        fan_in = in_dim if l == 0 else hidden_dim
        bound = 1.0 / (fan_in ** 0.5)
        w = jax.random.uniform(keys[1 + 2 * l], (hidden_dim, fan_in), jnp.float32, -bound, bound)
        b = jax.random.uniform(keys[2 + 2 * l], (hidden_dim,), jnp.float32, -bound, bound)
        weights.append(w)
        biases.append(b)

    out = simple_mlp_forward(x, weights, biases)
    out = jax.block_until_ready(out)

    # Pure-JAX reference mirroring the PyTorch forward EXACTLY (all layers, relu between),
    # proving the dead-layer elimination in the kernel is numerically identical.
    xr = x
    y_ref = xr
    for l in range(num_layers):
        y_ref = xr @ weights[l].T + biases[l]
        if l != num_layers - 1:
            xr = jnp.maximum(xr, 0.0)

    assert out.shape == (batch, hidden_dim)
    assert jnp.allclose(out, y_ref, atol=1e-5, rtol=1e-5), "mismatch vs reference"

    print("KERNEL_OK")
</pallas_src>

<mosaic_0001>
module attributes {stable_mosaic.version = 11 : i64} {
  func.func @_last_layer_kernel(%arg0: i32, %arg1: memref<8x128xf32, #tpu.memory_space<vmem>>, %arg2: memref<128x128xf32, #tpu.memory_space<vmem>>, %arg3: memref<1x128xf32, #tpu.memory_space<vmem>>, %arg4: memref<8x128xf32, #tpu.memory_space<vmem>>) attributes {dimension_semantics = [#tpu.dimension_semantics<parallel>], iteration_bounds = array<i64: 1>, scalar_prefetch = 0 : i64, scratch_operands = 0 : i64, tpu.core_type = #tpu.core_type<tc>, window_params = [{transform_indices = @transform_0, window_bounds = array<i64: 8, 128>}, {pipeline_mode = #tpu.pipeline_mode<synchronous>, transform_indices = @transform_1, window_bounds = array<i64: 128, 128>}, {pipeline_mode = #tpu.pipeline_mode<synchronous>, transform_indices = @transform_2, window_bounds = array<i64: 1, 128>}, {transform_indices = @transform_3, window_bounds = array<i64: 8, 128>}]} {
    %c0 = arith.constant 0 : index
    %c0_0 = arith.constant 0 : index
    %0 = vector.load %arg1[%c0, %c0_0] : memref<8x128xf32, #tpu.memory_space<vmem>>, vector<8x128xf32>
    %cst = arith.constant 0.000000e+00 : f32
    %1 = vector.broadcast %cst : f32 to vector<8x128xf32>
    %2 = arith.maximumf %0, %1 : vector<8x128xf32>
    %c0_1 = arith.constant 0 : index
    %c0_2 = arith.constant 0 : index
    %3 = vector.load %arg2[%c0_1, %c0_2] : memref<128x128xf32, #tpu.memory_space<vmem>>, vector<128x128xf32>
    %cst_3 = arith.constant dense<0.000000e+00> : vector<8x128xf32>
    %4 = tpu.matmul %2, %3, %cst_3 {dimension_numbers = #tpu.dot_dimension_numbers<[1], [0], [0], [1], [0, 0, 1, 1], [], []>} : vector<8x128xf32>, vector<128x128xf32>, vector<8x128xf32> -> vector<8x128xf32>
    %c0_4 = arith.constant 0 : index
    %c0_5 = arith.constant 0 : index
    %5 = vector.load %arg3[%c0_4, %c0_5] : memref<1x128xf32, #tpu.memory_space<vmem>>, vector<1x128xf32>
    %6 = vector.broadcast %5 : vector<1x128xf32> to vector<8x128xf32>
    %7 = arith.addf %4, %6 : vector<8x128xf32>
    %c0_6 = arith.constant 0 : index
    %c0_7 = arith.constant 0 : index
    %8 = vector.load %arg4[%c0_6, %c0_7] : memref<8x128xf32, #tpu.memory_space<vmem>>, vector<8x128xf32>
    tpu.vector_store %arg4[%c0_6, %c0_7], %7 {strides = array<i32>} : memref<8x128xf32, #tpu.memory_space<vmem>>, vector<8x128xf32>,
    return
  }
  func.func @transform_0(%arg0: i32) -> (i32, i32) {
    %c0_i32 = arith.constant 0 : i32
    %c0_i32_0 = arith.constant 0 : i32
    return %arg0, %c0_i32 : i32, i32
  }
  func.func @transform_1(%arg0: i32) -> (i32, i32) {
    %c0_i32 = arith.constant 0 : i32
    %c0_i32_0 = arith.constant 0 : i32
    %c0_i32_1 = arith.constant 0 : i32
    return %c0_i32, %c0_i32_0 : i32, i32
  }
  func.func @transform_2(%arg0: i32) -> (i32, i32) {
    %c0_i32 = arith.constant 0 : i32
    %c0_i32_0 = arith.constant 0 : i32
    %c0_i32_1 = arith.constant 0 : i32
    return %c0_i32, %c0_i32_0 : i32, i32
  }
  func.func @transform_3(%arg0: i32) -> (i32, i32) {
    %c0_i32 = arith.constant 0 : i32
    %c0_i32_0 = arith.constant 0 : i32
    return %arg0, %c0_i32 : i32, i32
  }
}

</mosaic_0001>

<llo_original>
// kernel: tpu_custom_call.1
$region0: #{tpu_custom_call.1}
  #allocation0 [shape = 'u32[]', space=smem, size = 0x4, offset = 0x4, fixed_abs, tag = 'smem constant byte address 0x4 - core index']
  #allocation1 [shape = 'u32[72,128]{1,0:T(1,128)}', space=vmem, size = 0x9000, scoped, tag = 'internal scratch']
  %s0 = inlined_call_operand.hbm [shape: f32[8,128], index: 0, kind: input, shape index: {}]
  %s1 = inlined_call_operand.hbm [shape: f32[128,128], index: 1, kind: input, shape index: {}]
  %s2 = inlined_call_operand.vmem [shape: f32[1,128], index: 2, kind: input, shape index: {}]
  %s3 = inlined_call_operand.hbm [shape: f32[8,128], index: 3, kind: output, shape index: {}]
  %s4 = sld [smem:[#allocation0]]
  $region30: #{tpu_custom_call.1} parent=0
    _
  %s6 = ssub.s32 1, %s4
  %s7 = scalar_select 0, %s6, %s4
  $region1: #{tpu_custom_call.1} parent=0
    #allocation2 [shape = 'u8[4096]{0}', space=vmem, size = 0x1000, scoped, tag = 'input window, operand 0, single buffered']
    #allocation3 [shape = 's32[1]{0}', space=sflag, size = 0x4, scoped, tag = 'scoped memory for tpu_custom_call.1']
    #allocation4 [shape = 's32[1]{0}', space=sflag, size = 0x4, scoped, tag = 'scoped memory for tpu_custom_call.1']
    #allocation5 [shape = 'u8[65536]{0}', space=vmem, size = 0x10000, scoped, tag = 'input window, operand 1, single buffered']
    #allocation6 [shape = 's32[1]{0}', space=sflag, size = 0x4, scoped, tag = 'scoped memory for tpu_custom_call.1']
    #allocation7 [shape = 'u8[4096]{0}', space=vmem, size = 0x1000, scoped, tag = 'output window, operand 0, single buffered']
    %8 = vsyncpa [#allocation3], 0
    %9 = vsyncpa [#allocation6], 0
    %10 = vsyncpa [#allocation4], 0
    // Predicated region
    $region2: #{tpu_custom_call.1} parent=1 // pred_check
      _
    $region3: #{tpu_custom_call.1} parent=1 // pred_check_branch
      %12 = sbr.rel (0) target = $region5
    $region4: #{tpu_custom_call.1} parent=1 // pred_region
      %14 = vsyncadd [#allocation3], 0
      %s16 = sshll.u32 %s0, 4
      %s17 = int_to_ptr.hbm [resolvable:$true] %s16
      %s18 = sshll.u32 [#allocation2], 4
      %s19 = int_to_ptr.vmem [resolvable:$true] %s18
      %21 = dma.hbm_to_vmem [thread:$0]  %s17, 128, %s19, [#allocation3]
    $region5: #{tpu_custom_call.1} parent=1 // pred_fallthru
      _
    // Predicated region
    $region6: #{tpu_custom_call.1} parent=1 // pred_check
      _
    $region7: #{tpu_custom_call.1} parent=1 // pred_check_branch
      %23 = sbr.rel (0) target = $region9
    $region8: #{tpu_custom_call.1} parent=1 // pred_region
      %25 = vsyncadd [#allocation6], 0
      %s26 = sshll.u32 %s1, 4
      %s27 = int_to_ptr.hbm [resolvable:$true] %s26
      %s28 = sshll.u32 [#allocation5], 4
      %s29 = int_to_ptr.vmem [resolvable:$true] %s28
      %34 = dma.hbm_to_vmem [thread:$0]  %s27, 2048, %s29, [#allocation6], 128, 128, 8
    $region9: #{tpu_custom_call.1} parent=1 // pred_fallthru
      _
    // Predicated region
    $region10: #{tpu_custom_call.1} parent=1 // pred_check
      _
    $region11: #{tpu_custom_call.1} parent=1 // pred_check_branch
      %36 = sbr.rel (0) target = $region13
    $region12: #{tpu_custom_call.1} parent=1 // pred_region
      _
    $region13: #{tpu_custom_call.1} parent=1 // pred_fallthru
      _
    // Predicated region
    $region14: #{tpu_custom_call.1} parent=1 // pred_check
      _
    $region15: #{tpu_custom_call.1} parent=1 // pred_check_branch
      %38 = sbr.rel (0) target = $region17
    $region16: #{tpu_custom_call.1} parent=1 // pred_region
      %40 = dma.done [#allocation3], 128
    $region17: #{tpu_custom_call.1} parent=1 // pred_fallthru
      _
    // Predicated region
    $region18: #{tpu_custom_call.1} parent=1 // pred_check
      _
    $region19: #{tpu_custom_call.1} parent=1 // pred_check_branch
      %42 = sbr.rel (0) target = $region21
    $region20: #{tpu_custom_call.1} parent=1 // pred_region
      %44 = dma.done [#allocation6], 2048
    $region21: #{tpu_custom_call.1} parent=1 // pred_fallthru
      _
    %v45 = vld [vmem:[#allocation2] sm:$0xff]
    %v46 = vmax.f32 %v45, 0.0
    %v47 = vld [vmem:[#allocation5] sm:$0xff]
    %v48 = vld [vmem:[#allocation5 + $0x8] sm:$0xff]
    %v49 = vld [vmem:[#allocation5 + $0x10] sm:$0xff]
    %v50 = vld [vmem:[#allocation5 + $0x18] sm:$0xff]
    %v51 = vld [vmem:[#allocation5 + $0x20] sm:$0xff]
    %v52 = vld [vmem:[#allocation5 + $0x28] sm:$0xff]
    %v53 = vld [vmem:[#allocation5 + $0x30] sm:$0xff]
    %v54 = vld [vmem:[#allocation5 + $0x38] sm:$0xff]
    %v55 = vld [vmem:[#allocation5 + $0x40] sm:$0xff]
    %v56 = vld [vmem:[#allocation5 + $0x48] sm:$0xff]
    %v57 = vld [vmem:[#allocation5 + $0x50] sm:$0xff]
    %v58 = vld [vmem:[#allocation5 + $0x58] sm:$0xff]
    %v59 = vld [vmem:[#allocation5 + $0x60] sm:$0xff]
    %v60 = vld [vmem:[#allocation5 + $0x68] sm:$0xff]
    %v61 = vld [vmem:[#allocation5 + $0x70] sm:$0xff]
    %v62 = vld [vmem:[#allocation5 + $0x78] sm:$0xff]
    %v63 = vld [vmem:[%s2] sm:$0x1]
    %v65 = vperm.slane %v63, 0
    %67 = vmatpush.msra.mxu0 %v62
    %68 = vmatpush.msra.mxu0 %v61
    %69 = vmatpush.msra.mxu0 %v60
    %70 = vmatpush.msra.mxu0 %v59
    %71 = vmatpush.msra.mxu0 %v58
    %72 = vmatpush.msra.mxu0 %v57
    %73 = vmatpush.msra.mxu0 %v56
    %74 = vmatpush.msra.mxu0 %v55
    %75 = vmatpush.msra.mxu0 %v54
    %76 = vmatpush.msra.mxu0 %v53
    %77 = vmatpush.msra.mxu0 %v52
    %78 = vmatpush.msra.mxu0 %v51
    %79 = vmatpush.msra.mxu0 %v50
    %80 = vmatpush.msra.mxu0 %v49
    %81 = vmatpush.msra.mxu0 %v48
    %82 = vmatpush.msra.mxu0 %v47
    %83 = vmatmul.f32.gmra.mxu0 %v46
    %v84 = vpop.f32.mrf.mxu0
    %v85 = vadd.f32 %v65, %v84
    %86 = vdwg.mxu0
    %87 = vst [vmem:[#allocation7] sm:$0xff] %v85
    // Predicated region
    $region22: #{tpu_custom_call.1} parent=1 // pred_check
      _
    $region23: #{tpu_custom_call.1} parent=1 // pred_check_branch
      %89 = sbr.rel (0) target = $region25
    $region24: #{tpu_custom_call.1} parent=1 // pred_region
      %91 = vsyncadd [#allocation4], 0
      %s93 = sshll.u32 [#allocation7], 4
      %s94 = int_to_ptr.vmem [resolvable:$true] %s93
      %s95 = sshll.u32 %s3, 4
      %s96 = int_to_ptr.hbm [resolvable:$true] %s95
      %98 = dma.vmem_to_hbm [thread:$0]  %s94, 128, %s96, [#allocation4]
    $region25: #{tpu_custom_call.1} parent=1 // pred_fallthru
      _
    // Predicated region
    $region26: #{tpu_custom_call.1} parent=1 // pred_check
      _
    $region27: #{tpu_custom_call.1} parent=1 // pred_check_branch
      %100 = sbr.rel (0) target = $region29
    $region28: #{tpu_custom_call.1} parent=1 // pred_region
      %102 = dma.done [#allocation4], 128
    $region29: #{tpu_custom_call.1} parent=1 // pred_fallthru
      _
    %103 = vsyncpa [#allocation3], 1
    %104 = vsyncpa [#allocation6], 1
    %105 = vsyncpa [#allocation4], 1

</llo_original>
